<compile_context>
chip_gen: v6e
topology: v6e:2x2x1
jax: 0.10.0
libtpu: 0.0.40
codegen_flags: <defaults>
</compile_context>

<pallas_src>
import jax
import jax.numpy as jnp
from jax.experimental import pallas as pl
from jax.experimental.pallas import tpu as pltpu


# ----------------------------- kernels ------------------------------------


def _linear_bias_kernel(x_ref, w_ref, b_ref, out_ref):
    """out = x @ w + b for one (tm, tn) tile; K fully resident (no acc)."""
    acc = jnp.dot(x_ref[...], w_ref[...], preferred_element_type=jnp.float32)
    out_ref[...] = (acc + b_ref[...]).astype(out_ref.dtype)


def _linear_bias_kernel_ktiled(x_ref, w_ref, b_ref, out_ref, acc_ref):
    """K-tiled fallback: accumulate over the last grid axis in f32 VMEM."""
    k = pl.program_id(2)

    @pl.when(k == 0)
    def _():
        acc_ref[...] = jnp.zeros_like(acc_ref)

    acc_ref[...] += jnp.dot(x_ref[...], w_ref[...],
                            preferred_element_type=jnp.float32)

    @pl.when(k == pl.num_programs(2) - 1)
    def _():
        out_ref[...] = (acc_ref[...] + b_ref[...]).astype(out_ref.dtype)


# --------------------------- helpers / sizing -------------------------------


def _round_up(v, m):
    return -(-v // m) * m


def _sublane_multiple(dtype):
    bits = jnp.dtype(dtype).itemsize * 8
    if bits >= 32:
        return 8
    if bits == 16:
        return 16
    return 32


def _tpu_vmem_and_cores():
    vmem = 128 << 20
    cores = 1
    try:
        info = pltpu.get_tpu_info()
        vmem = int(info.vmem_capacity_bytes)
        for attr in ("num_cores", "tensor_core_count", "core_count"):
            v = getattr(info, attr, None)
            if v:
                cores = int(v)
                break
    except Exception:
        pass
    return vmem, cores


def _vmem_budget(vmem_cap):
    # Generation-aware: leave Mosaic internal-scratch headroom.
    if vmem_cap <= (64 << 20):               # v7x-class: 64 MiB per TC
        return 48 << 20
    return int(min(vmem_cap - (24 << 20), 112 << 20))   # v5e / v6e: 128 MiB


def _select_tiles(kp0, np0, in_bytes, out_bytes, budget, num_cores, sub):
    """Pick (tm_cap, tn, tk).  Prefer tk == K (single-phase kernel)."""
    tn = min(512, np0)
    # Keep both TensorCores busy when the batch fits a single M tile.
    if num_cores >= 2 and np0 // tn < 2 and np0 % 256 == 0:
        tn = min(tn, np0 // 2)

    def need(tm, tk, with_acc):
        v = (2 * (tm * tk + tk * tn) * in_bytes     # double-buffered x, W
             + 2 * tm * tn * out_bytes              # double-buffered out
             + 2 * tn * 4)                          # bias
        if with_acc:
            v += tm * tn * 4
        return v

    # Collapse K entirely with the largest tm that fits the budget.
    for tm_cap in (2048, 1024, 512, 256, 128, 64, 32, 16, 8):
        if tm_cap < sub:
            continue
        if need(tm_cap, kp0, False) <= budget:
            return tm_cap, tn, kp0
    # Fall back to a K-tiled reduction for very large IN.
    for tk in (4096, 2048, 1024, 512, 256, 128):
        if tk >= kp0:
            continue
        for tm_cap in (1024, 512, 256, 128, 64, 32, 16, 8):
            if tm_cap < sub:
                continue
            if need(tm_cap, tk, True) <= budget:
                return tm_cap, tn, tk
    return max(sub, 8), 128, 128


# ----------------------------- init-time prep -------------------------------


def prepare_output_layer_params(w_reg, b_reg, w_extra=None, b_extra=None,
                                *, compute_dtype=None):
    """One-time weight preparation (hoisted out of the forward path).

    Fuses both heads, optionally casts to the MXU compute dtype, transposes to
    (IN, OUT) so the kernel contracts NN, and pads to tile multiples.  Returns
    a params dict consumed by output_layer_apply().
    """
    if w_extra is not None:
        w = jnp.concatenate([w_reg, w_extra], axis=0)       # (OUT_REG+EXT, IN)
        b = jnp.concatenate([b_reg, b_extra], axis=0)
        out_extra = int(w_extra.shape[0])
    else:
        w, b = w_reg, b_reg
        out_extra = 0
    out_reg = int(w_reg.shape[0])
    out_total, in_features = int(w.shape[0]), int(w.shape[1])

    if compute_dtype is not None:
        w = w.astype(compute_dtype)
    cdtype = w.dtype
    b = b.astype(jnp.float32)                                # bias add stays f32

    in_bytes = jnp.dtype(cdtype).itemsize
    sub = _sublane_multiple(cdtype)
    vmem_cap, num_cores = _tpu_vmem_and_cores()
    budget = _vmem_budget(vmem_cap)

    kp0 = _round_up(in_features, 128)
    np0 = _round_up(out_total, 128)
    tm_cap, tn, tk = _select_tiles(kp0, np0, in_bytes, 4, budget,
                                   num_cores, sub)

    kp = _round_up(in_features, tk)
    n_pad = _round_up(out_total, tn)

    # Transpose once to (IN, OUT) and zero-pad to (kp, n_pad).
    w_t = jnp.pad(w.T, ((0, kp - in_features), (0, n_pad - out_total)))
    b_p = jnp.pad(b, (0, n_pad - out_total)).reshape(1, n_pad)
    w_t = jax.block_until_ready(w_t)
    b_p = jax.block_until_ready(b_p)

    return dict(w=w_t, b=b_p,
                out_reg=out_reg, out_extra=out_extra,
                in_features=in_features, kp=kp, n_pad=n_pad,
                tm_cap=tm_cap, tn=tn, tk=tk, sub=sub,
                compute_dtype=cdtype, in_bytes=in_bytes,
                vmem_budget=budget)


# ------------------------------- forward ------------------------------------


def output_layer_apply(params, x):
    """Forward pass of OutputLayer with pre-prepared params.

    x: (B, IN).  Returns (regular_outputs, extra_outputs) where extra_outputs
    is None when the module has no extra head, mirroring the torch module.
    """
    B = int(x.shape[0])
    out_dtype = x.dtype
    cdtype = params["compute_dtype"]
    kp, n_pad = params["kp"], params["n_pad"]
    tn, tk, sub = params["tn"], params["tk"], params["sub"]
    in_features = params["in_features"]

    xin = x.astype(cdtype)
    tm = min(params["tm_cap"], max(sub, _round_up(B, sub)))
    mp = _round_up(B, tm)
    if (mp, kp) != (B, in_features):
        xin = jnp.pad(xin, ((0, mp - B), (0, kp - in_features)))

    grid_m, grid_n, grid_k = mp // tm, n_pad // tn, kp // tk
    in_bytes = params["in_bytes"]
    out_bytes = jnp.dtype(out_dtype).itemsize

    need = (2 * (tm * tk + tk * tn) * in_bytes + 2 * tm * tn * out_bytes
            + 2 * tn * 4 + (tm * tn * 4 if grid_k > 1 else 0))
    vmem_limit = int(min(params["vmem_budget"], max(2 * need, 16 << 20)))

    cost = pl.CostEstimate(
        flops=2 * mp * n_pad * kp,
        transcendentals=0,
        bytes_accessed=(grid_n * mp * kp * in_bytes      # x re-read per N tile
                        + grid_m * kp * n_pad * in_bytes  # W re-read per M tile
                        + grid_m * n_pad * 4              # bias
                        + mp * n_pad * out_bytes))        # output written once

    if grid_k == 1:
        out = pl.pallas_call(
            _linear_bias_kernel,
            out_shape=jax.ShapeDtypeStruct((mp, n_pad), out_dtype),
            grid=(grid_m, grid_n),
            in_specs=[
                pl.BlockSpec((tm, tk), lambda i, j: (i, 0)),   # x
                pl.BlockSpec((tk, tn), lambda i, j: (0, j)),   # W (IN, OUT)
                pl.BlockSpec((1, tn), lambda i, j: (0, j)),    # bias
            ],
            out_specs=pl.BlockSpec((tm, tn), lambda i, j: (i, j)),
            compiler_params=pltpu.CompilerParams(
                dimension_semantics=("parallel", "parallel"),
                vmem_limit_bytes=vmem_limit),
            cost_estimate=cost,
        )(xin, params["w"], params["b"])
    else:
        out = pl.pallas_call(
            _linear_bias_kernel_ktiled,
            out_shape=jax.ShapeDtypeStruct((mp, n_pad), out_dtype),
            grid=(grid_m, grid_n, grid_k),
            in_specs=[
                pl.BlockSpec((tm, tk), lambda i, j, k: (i, k)),   # x
                pl.BlockSpec((tk, tn), lambda i, j, k: (k, j)),   # W (IN, OUT)
                pl.BlockSpec((1, tn), lambda i, j, k: (0, j)),    # bias
            ],
            out_specs=pl.BlockSpec((tm, tn), lambda i, j, k: (i, j)),
            scratch_shapes=[pltpu.VMEM((tm, tn), jnp.float32)],
            compiler_params=pltpu.CompilerParams(
                dimension_semantics=("parallel", "parallel", "arbitrary"),
                vmem_limit_bytes=vmem_limit),
            cost_estimate=cost,
        )(xin, params["w"], params["b"])

    out_reg, out_extra = params["out_reg"], params["out_extra"]
    reg = out[:B, :out_reg]
    extra = out[:B, out_reg:out_reg + out_extra] if out_extra > 0 else None
    return reg, extra


def output_layer_forward(x, w_reg, b_reg, w_extra=None, b_extra=None,
                         *, compute_dtype=None):
    """Convenience one-shot wrapper (prep + apply).  For real use, call
    prepare_output_layer_params once at init and output_layer_apply per step."""
    params = prepare_output_layer_params(w_reg, b_reg, w_extra, b_extra,
                                         compute_dtype=compute_dtype)
    return output_layer_apply(params, x)


# --------------------------------- test --------------------------------------


if __name__ == "__main__":
    # Small shapes consistent with the module: fc = Linear(IN, OUT_REG),
    # extra head = Linear(IN, NUM_EXTRA).
    B, IN, OUT_REG, NUM_EXTRA = 8, 32, 16, 4

    key = jax.random.PRNGKey(0)
    kx, kwr, kbr, kwe, kbe = jax.random.split(key, 5)

    x = jax.random.normal(kx, (B, IN), dtype=jnp.float32)

    # Deterministic "PyTorch-style" init: U(-1/sqrt(IN), 1/sqrt(IN)).
    bound = 1.0 / jnp.sqrt(jnp.float32(IN))
    w_reg = jax.random.uniform(kwr, (OUT_REG, IN), jnp.float32, -bound, bound)
    b_reg = jax.random.uniform(kbr, (OUT_REG,), jnp.float32, -bound, bound)
    w_extra = jax.random.uniform(kwe, (NUM_EXTRA, IN), jnp.float32, -bound, bound)
    b_extra = jax.random.uniform(kbe, (NUM_EXTRA,), jnp.float32, -bound, bound)

    # Reference (same semantics as torch nn.Linear).
    reg_ref = x @ w_reg.T + b_reg
    extra_ref = x @ w_extra.T + b_extra

    # --- f32 path, prep hoisted to init, forward called twice --------------
    params = prepare_output_layer_params(w_reg, b_reg, w_extra, b_extra)
    reg_out, extra_out = output_layer_apply(params, x)
    jax.block_until_ready(reg_out)
    jax.block_until_ready(extra_out)
    assert jnp.allclose(reg_out, reg_ref, atol=1e-4), "regular head mismatch"
    assert jnp.allclose(extra_out, extra_ref, atol=1e-4), "extra head mismatch"

    reg_out2, extra_out2 = output_layer_apply(params, x)   # reuse prepared W
    jax.block_until_ready(reg_out2)
    assert jnp.allclose(reg_out2, reg_ref, atol=1e-4), "second-call mismatch"

    # --- num_extra == 0 path ------------------------------------------------
    reg_only, none_out = output_layer_forward(x, w_reg, b_reg)
    jax.block_until_ready(reg_only)
    assert none_out is None
    assert jnp.allclose(reg_only, reg_ref, atol=1e-4), "regular-only mismatch"

    # --- bf16 operand path (f32 accumulation) — relaxed tolerance -----------
    params_bf = prepare_output_layer_params(w_reg, b_reg, w_extra, b_extra,
                                            compute_dtype=jnp.bfloat16)
    reg_bf, extra_bf = output_layer_apply(params_bf, x)
    jax.block_until_ready(reg_bf)
    assert jnp.allclose(reg_bf, reg_ref, atol=5e-2, rtol=5e-2), "bf16 reg mismatch"
    assert jnp.allclose(extra_bf, extra_ref, atol=5e-2, rtol=5e-2), "bf16 extra mismatch"

    print("KERNEL_OK")
</pallas_src>

<mosaic_0001>
module attributes {stable_mosaic.version = 11 : i64} {
  func.func @_linear_bias_kernel(%arg0: i32, %arg1: i32, %arg2: memref<8x128xf32, #tpu.memory_space<vmem>>, %arg3: memref<128x128xf32, #tpu.memory_space<vmem>>, %arg4: memref<1x128xf32, #tpu.memory_space<vmem>>, %arg5: memref<8x128xf32, #tpu.memory_space<vmem>>) attributes {dimension_semantics = [#tpu.dimension_semantics<parallel>, #tpu.dimension_semantics<parallel>], iteration_bounds = array<i64: 1, 1>, scalar_prefetch = 0 : i64, scratch_operands = 0 : i64, tpu.core_type = #tpu.core_type<tc>, window_params = [{transform_indices = @transform_0, window_bounds = array<i64: 8, 128>}, {transform_indices = @transform_1, window_bounds = array<i64: 128, 128>}, {transform_indices = @transform_2, window_bounds = array<i64: 1, 128>}, {transform_indices = @transform_3, window_bounds = array<i64: 8, 128>}]} {
    %c0 = arith.constant 0 : index
    %c0_0 = arith.constant 0 : index
    %0 = vector.load %arg2[%c0, %c0_0] : memref<8x128xf32, #tpu.memory_space<vmem>>, vector<8x128xf32>
    %c0_1 = arith.constant 0 : index
    %c0_2 = arith.constant 0 : index
    %1 = vector.load %arg3[%c0_1, %c0_2] : memref<128x128xf32, #tpu.memory_space<vmem>>, vector<128x128xf32>
    %cst = arith.constant dense<0.000000e+00> : vector<8x128xf32>
    %2 = tpu.matmul %0, %1, %cst {dimension_numbers = #tpu.dot_dimension_numbers<[1], [0], [0], [1], [0, 0, 1, 1], [], []>} : vector<8x128xf32>, vector<128x128xf32>, vector<8x128xf32> -> vector<8x128xf32>
    %c0_3 = arith.constant 0 : index
    %c0_4 = arith.constant 0 : index
    %3 = vector.load %arg4[%c0_3, %c0_4] : memref<1x128xf32, #tpu.memory_space<vmem>>, vector<1x128xf32>
    %4 = vector.broadcast %3 : vector<1x128xf32> to vector<8x128xf32>
    %5 = arith.addf %2, %4 : vector<8x128xf32>
    %c0_5 = arith.constant 0 : index
    %c0_6 = arith.constant 0 : index
    %6 = vector.load %arg5[%c0_5, %c0_6] : memref<8x128xf32, #tpu.memory_space<vmem>>, vector<8x128xf32>
    tpu.vector_store %arg5[%c0_5, %c0_6], %5 {strides = array<i32>} : memref<8x128xf32, #tpu.memory_space<vmem>>, vector<8x128xf32>,
    return
  }
  func.func @transform_0(%arg0: i32, %arg1: i32) -> (i32, i32) {
    %c0_i32 = arith.constant 0 : i32
    %c0_i32_0 = arith.constant 0 : i32
    return %arg0, %c0_i32 : i32, i32
  }
  func.func @transform_1(%arg0: i32, %arg1: i32) -> (i32, i32) {
    %c0_i32 = arith.constant 0 : i32
    %c0_i32_0 = arith.constant 0 : i32
    return %c0_i32, %arg1 : i32, i32
  }
  func.func @transform_2(%arg0: i32, %arg1: i32) -> (i32, i32) {
    %c0_i32 = arith.constant 0 : i32
    %c0_i32_0 = arith.constant 0 : i32
    return %c0_i32, %arg1 : i32, i32
  }
  func.func @transform_3(%arg0: i32, %arg1: i32) -> (i32, i32) {
    %c0_i32 = arith.constant 0 : i32
    return %arg0, %arg1 : i32, i32
  }
}

</mosaic_0001>

<llo_original>
// kernel: tpu_custom_call.1
$region0: #{tpu_custom_call.1}
  #allocation0 [shape = 'u32[]', space=smem, size = 0x4, offset = 0x4, fixed_abs, tag = 'smem constant byte address 0x4 - core index']
  #allocation1 [shape = 'u32[144,128]{1,0:T(1,128)}', space=vmem, size = 0x12000, scoped, tag = 'internal scratch']
  %s0 = inlined_call_operand.hbm [shape: f32[8,128], index: 0, kind: input, shape index: {}]
  %s1 = inlined_call_operand.hbm [shape: f32[128,128], index: 1, kind: input, shape index: {}]
  %s2 = inlined_call_operand.vmem [shape: f32[1,128], index: 2, kind: input, shape index: {}]
  %s3 = inlined_call_operand.hbm [shape: f32[8,128], index: 3, kind: output, shape index: {}]
  %s4 = sld [smem:[#allocation0]]
  $region30: #{tpu_custom_call.1} parent=0
    _
  %s6 = ssub.s32 1, %s4
  %s7 = scalar_select 0, %s6, %s4
  $region1: #{tpu_custom_call.1} parent=0
    #allocation2 [shape = 'u8[4096]{0}', space=vmem, size = 0x1000, scoped, tag = 'input window, operand 0, single buffered']
    #allocation3 [shape = 's32[1]{0}', space=sflag, size = 0x4, scoped, tag = 'scoped memory for tpu_custom_call.1']
    #allocation4 [shape = 's32[1]{0}', space=sflag, size = 0x4, scoped, tag = 'scoped memory for tpu_custom_call.1']
    #allocation5 [shape = 'u8[65536]{0}', space=vmem, size = 0x10000, scoped, tag = 'input window, operand 1, single buffered']
    #allocation6 [shape = 's32[1]{0}', space=sflag, size = 0x4, scoped, tag = 'scoped memory for tpu_custom_call.1']
    #allocation7 [shape = 'u8[4096]{0}', space=vmem, size = 0x1000, scoped, tag = 'output window, operand 0, single buffered']
    %8 = vsyncpa [#allocation3], 0
    %9 = vsyncpa [#allocation6], 0
    %10 = vsyncpa [#allocation4], 0
    // Predicated region
    $region2: #{tpu_custom_call.1} parent=1 // pred_check
      _
    $region3: #{tpu_custom_call.1} parent=1 // pred_check_branch
      %12 = sbr.rel (0) target = $region5
    $region4: #{tpu_custom_call.1} parent=1 // pred_region
      %s14 = ssub.s32 128, 128
      %15 = vsyncadd [#allocation3], %s14
      %s17 = sshll.u32 [#allocation2], 4
      %s18 = int_to_ptr.vmem [resolvable:$true] %s17
      %20 = dma.hbm_to_vmem [thread:$0]  %s0, 128, %s18, [#allocation3]
    $region5: #{tpu_custom_call.1} parent=1 // pred_fallthru
      _
    // Predicated region
    $region6: #{tpu_custom_call.1} parent=1 // pred_check
      _
    $region7: #{tpu_custom_call.1} parent=1 // pred_check_branch
      %22 = sbr.rel (0) target = $region9
    $region8: #{tpu_custom_call.1} parent=1 // pred_region
      %s24 = ssub.s32 2048, 2048
      %25 = vsyncadd [#allocation6], %s24
      %s26 = sshll.u32 [#allocation5], 4
      %s27 = int_to_ptr.vmem [resolvable:$true] %s26
      %32 = dma.hbm_to_vmem [thread:$0]  %s1, 2048, %s27, [#allocation6], 128, 128, 8
    $region9: #{tpu_custom_call.1} parent=1 // pred_fallthru
      _
    // Predicated region
    $region10: #{tpu_custom_call.1} parent=1 // pred_check
      _
    $region11: #{tpu_custom_call.1} parent=1 // pred_check_branch
      %34 = sbr.rel (0) target = $region13
    $region12: #{tpu_custom_call.1} parent=1 // pred_region
      _
    $region13: #{tpu_custom_call.1} parent=1 // pred_fallthru
      _
    // Predicated region
    $region14: #{tpu_custom_call.1} parent=1 // pred_check
      _
    $region15: #{tpu_custom_call.1} parent=1 // pred_check_branch
      %36 = sbr.rel (0) target = $region17
    $region16: #{tpu_custom_call.1} parent=1 // pred_region
      %37 = dma.done [#allocation3], 128
    $region17: #{tpu_custom_call.1} parent=1 // pred_fallthru
      _
    // Predicated region
    $region18: #{tpu_custom_call.1} parent=1 // pred_check
      _
    $region19: #{tpu_custom_call.1} parent=1 // pred_check_branch
      %39 = sbr.rel (0) target = $region21
    $region20: #{tpu_custom_call.1} parent=1 // pred_region
      %40 = dma.done [#allocation6], 2048
    $region21: #{tpu_custom_call.1} parent=1 // pred_fallthru
      _
    %v41 = vld [vmem:[#allocation2] sm:$0xff]
    %v42 = vld [vmem:[#allocation5] sm:$0xff]
    %v43 = vld [vmem:[#allocation5 + $0x8] sm:$0xff]
    %v44 = vld [vmem:[#allocation5 + $0x10] sm:$0xff]
    %v45 = vld [vmem:[#allocation5 + $0x18] sm:$0xff]
    %v46 = vld [vmem:[#allocation5 + $0x20] sm:$0xff]
    %v47 = vld [vmem:[#allocation5 + $0x28] sm:$0xff]
    %v48 = vld [vmem:[#allocation5 + $0x30] sm:$0xff]
    %v49 = vld [vmem:[#allocation5 + $0x38] sm:$0xff]
    %v50 = vld [vmem:[#allocation5 + $0x40] sm:$0xff]
    %v51 = vld [vmem:[#allocation5 + $0x48] sm:$0xff]
    %v52 = vld [vmem:[#allocation5 + $0x50] sm:$0xff]
    %v53 = vld [vmem:[#allocation5 + $0x58] sm:$0xff]
    %v54 = vld [vmem:[#allocation5 + $0x60] sm:$0xff]
    %v55 = vld [vmem:[#allocation5 + $0x68] sm:$0xff]
    %v56 = vld [vmem:[#allocation5 + $0x70] sm:$0xff]
    %v57 = vld [vmem:[#allocation5 + $0x78] sm:$0xff]
    %v58 = vld [vmem:[%s2] sm:$0x1]
    %v60 = vlaneseq
    %v61 = vshrl.u32 %v60, 7
    %v62 = vsub.s32 0, %v61
    %v63 = vrot.slane %v58, %v62
    %65 = vmatprep.subr.mxu0 0.0
    %66 = vmatpush1.msra.mxu0 %v57
    %67 = vmatprep.subr.mxu0 0.0
    %68 = vmatpush1.msra.mxu0 %v56
    %69 = vmatprep.subr.mxu0 0.0
    %70 = vmatpush1.msra.mxu0 %v55
    %71 = vmatprep.subr.mxu0 0.0
    %72 = vmatpush1.msra.mxu0 %v54
    %73 = vmatprep.subr.mxu0 0.0
    %74 = vmatpush1.msra.mxu0 %v53
    %75 = vmatprep.subr.mxu0 0.0
    %76 = vmatpush1.msra.mxu0 %v52
    %77 = vmatprep.subr.mxu0 0.0
    %78 = vmatpush1.msra.mxu0 %v51
    %79 = vmatprep.subr.mxu0 0.0
    %80 = vmatpush1.msra.mxu0 %v50
    %81 = vmatprep.subr.mxu0 0.0
    %82 = vmatpush1.msra.mxu0 %v49
    %83 = vmatprep.subr.mxu0 0.0
    %84 = vmatpush1.msra.mxu0 %v48
    %85 = vmatprep.subr.mxu0 0.0
    %86 = vmatpush1.msra.mxu0 %v47
    %87 = vmatprep.subr.mxu0 0.0
    %88 = vmatpush1.msra.mxu0 %v46
    %89 = vmatprep.subr.mxu0 0.0
    %90 = vmatpush1.msra.mxu0 %v45
    %91 = vmatprep.subr.mxu0 0.0
    %92 = vmatpush1.msra.mxu0 %v44
    %93 = vmatprep.subr.mxu0 0.0
    %94 = vmatpush1.msra.mxu0 %v43
    %95 = vmatprep.subr.mxu0 0.0
    %96 = vmatpush1.msra.mxu0 %v42
    %97 = vmatprep.subr.mxu0 0.0
    %98 = vmatpush2.msra.mxu0 0.0
    %99 = vmatprep.subr.mxu0 0.0
    %100 = vmatpush2.msra.mxu0 0.0
    %101 = vmatprep.subr.mxu0 0.0
    %102 = vmatpush2.msra.mxu0 0.0
    %103 = vmatprep.subr.mxu0 0.0
    %104 = vmatpush2.msra.mxu0 0.0
    %105 = vmatprep.subr.mxu0 0.0
    %106 = vmatpush2.msra.mxu0 0.0
    %107 = vmatprep.subr.mxu0 0.0
    %108 = vmatpush2.msra.mxu0 0.0
    %109 = vmatprep.subr.mxu0 0.0
    %110 = vmatpush2.msra.mxu0 0.0
    %111 = vmatprep.subr.mxu0 0.0
    %112 = vmatpush2.msra.mxu0 0.0
    %113 = vmatprep.subr.mxu0 0.0
    %114 = vmatpush2.msra.mxu0 0.0
    %115 = vmatprep.subr.mxu0 0.0
    %116 = vmatpush2.msra.mxu0 0.0
    %117 = vmatprep.subr.mxu0 0.0
    %118 = vmatpush2.msra.mxu0 0.0
    %119 = vmatprep.subr.mxu0 0.0
    %120 = vmatpush2.msra.mxu0 0.0
    %121 = vmatprep.subr.mxu0 0.0
    %122 = vmatpush2.msra.mxu0 0.0
    %123 = vmatprep.subr.mxu0 0.0
    %124 = vmatpush2.msra.mxu0 0.0
    %125 = vmatprep.subr.mxu0 0.0
    %126 = vmatpush2.msra.mxu0 0.0
    %127 = vmatprep.subr.mxu0 0.0
    %128 = vmatpush2.msra.mxu0 0.0
    %129 = vmatprep.mubr.f32.mxu0 0.0
    %130 = vmatmul.mubr.f32.gmra.mxu0 %v41
    %v131 = vpop.f32.mrf.mxu0
    %v132 = vadd.f32 %v63, %v131
    %v133 = vpop.f32.mrf.mxu0
    %134 = vdwg.mxu0
    %135 = vst [vmem:[#allocation7] sm:$0xff] %v132
    // Predicated region
    $region22: #{tpu_custom_call.1} parent=1 // pred_check
      _
    $region23: #{tpu_custom_call.1} parent=1 // pred_check_branch
      %137 = sbr.rel (0) target = $region25
    $region24: #{tpu_custom_call.1} parent=1 // pred_region
      %s139 = ssub.s32 128, 128
      %140 = vsyncadd [#allocation4], %s139
      %s142 = sshll.u32 [#allocation7], 4
      %s143 = int_to_ptr.vmem [resolvable:$true] %s142
      %145 = dma.vmem_to_hbm [thread:$0]  %s143, 128, %s3, [#allocation4]
    $region25: #{tpu_custom_call.1} parent=1 // pred_fallthru
      _
    // Predicated region
    $region26: #{tpu_custom_call.1} parent=1 // pred_check
      _
    $region27: #{tpu_custom_call.1} parent=1 // pred_check_branch
      %147 = sbr.rel (0) target = $region29
    $region28: #{tpu_custom_call.1} parent=1 // pred_region
      %148 = dma.done [#allocation4], 128
    $region29: #{tpu_custom_call.1} parent=1 // pred_fallthru
      _
    %149 = vsyncpa [#allocation3], 1
    %150 = vsyncpa [#allocation6], 1
    %151 = vsyncpa [#allocation4], 1

</llo_original>
